<compile_context>
chip_gen: v6e
topology: v6e:2x2x1
jax: 0.10.0
libtpu: 0.0.40
codegen_flags: <defaults>
</compile_context>

<pallas_src>
import functools
import math

import jax
import jax.numpy as jnp
from jax import lax
from jax.experimental import pallas as pl
from jax.experimental.pallas import tpu as pltpu

_VMEM_LIMIT = 32 * 1024 * 1024


def _gelu(x):
    # tanh-approximate GELU (same formula used in kernel and reference).
    return 0.5 * x * (1.0 + jnp.tanh(0.7978845608028654 * (x + 0.044715 * x * x * x)))


# ---------------------------------------------------------------------------
# Pallas kernels
# ---------------------------------------------------------------------------
def _matmul_kernel(*refs, act, has_gate, has_res):
    x_ref, w_ref, b_ref = refs[0], refs[1], refs[2]
    idx = 3
    gate_ref = None
    res_ref = None
    if has_gate:
        gate_ref = refs[idx]
        idx += 1
    if has_res:
        res_ref = refs[idx]
        idx += 1
    out_ref = refs[idx]

    acc = jnp.dot(x_ref[...], w_ref[...], preferred_element_type=jnp.float32)
    acc = acc + b_ref[...]
    if act == "gelu":
        acc = _gelu(acc)
    if gate_ref is not None:
        acc = acc * gate_ref[...]
    if res_ref is not None:
        acc = acc + res_ref[...]
    out_ref[...] = acc.astype(out_ref.dtype)


def _dwconv_kernel(*refs, kh, kw, H, W, act, has_res):
    x_ref, w_ref, b_ref = refs[0], refs[1], refs[2]
    res_ref = refs[3] if has_res else None
    out_ref = refs[-1]
    C = out_ref.shape[-1]

    w = w_ref[...].astype(jnp.float32)              # (kh, kw, C)
    acc = jnp.zeros((H, W, C), jnp.float32)
    # statically unrolled taps (kh*kw small: 25 / 7 / 11 / 21 / 9)
    for i in range(kh):
        for j in range(kw):
            tap = x_ref[0, i:i + H, j:j + W, :].astype(jnp.float32)
            acc = acc + tap * w[i:i + 1, j:j + 1, :]
    acc = acc + b_ref[...].reshape(1, 1, C)
    if act == "gelu":
        acc = _gelu(acc)
    if has_res:
        acc = acc + res_ref[0].astype(jnp.float32)
    out_ref[0] = acc.astype(out_ref.dtype)


def _affine_kernel(x_ref, s_ref, t_ref, o_ref):
    o_ref[...] = (x_ref[...].astype(jnp.float32) * s_ref[...] + t_ref[...]).astype(o_ref.dtype)


def _ln_kernel(x_ref, g_ref, b_ref, o_ref, *, eps):
    x = x_ref[...].astype(jnp.float32)
    mu = jnp.mean(x, axis=-1, keepdims=True)
    xc = x - mu
    var = jnp.mean(xc * xc, axis=-1, keepdims=True)
    inv = lax.rsqrt(var + eps)
    o_ref[...] = (xc * inv * g_ref[...] + b_ref[...]).astype(o_ref.dtype)


# ---------------------------------------------------------------------------
# Pallas wrappers
# ---------------------------------------------------------------------------
def pallas_matmul(x, w, b, *, act=None, gate=None, res=None, tm=128):
    """act((x @ w) + b) [* gate] [+ res]   with x:(M,K), w:(K,N), b:(N,)."""
    M, K = x.shape
    N = w.shape[1]
    Mp = pl.cdiv(M, tm) * tm

    def padrows(a):
        return a if a.shape[0] == Mp else jnp.pad(a, ((0, Mp - a.shape[0]), (0, 0)))

    operands = [padrows(x), w, b.reshape(1, N)]
    in_specs = [
        pl.BlockSpec((tm, K), lambda m: (m, 0)),
        pl.BlockSpec((K, N), lambda m: (0, 0)),
        pl.BlockSpec((1, N), lambda m: (0, 0)),
    ]
    has_gate = gate is not None
    has_res = res is not None
    if has_gate:
        operands.append(padrows(gate))
        in_specs.append(pl.BlockSpec((tm, N), lambda m: (m, 0)))
    if has_res:
        operands.append(padrows(res))
        in_specs.append(pl.BlockSpec((tm, N), lambda m: (m, 0)))

    out = pl.pallas_call(
        functools.partial(_matmul_kernel, act=act, has_gate=has_gate, has_res=has_res),
        out_shape=jax.ShapeDtypeStruct((Mp, N), jnp.float32),
        grid=(Mp // tm,),
        in_specs=in_specs,
        out_specs=pl.BlockSpec((tm, N), lambda m: (m, 0)),
        compiler_params=pltpu.CompilerParams(
            dimension_semantics=("parallel",), vmem_limit_bytes=_VMEM_LIMIT),
        cost_estimate=pl.CostEstimate(
            flops=int(2 * Mp * K * N + (2 + has_gate + has_res) * Mp * N),
            transcendentals=int(Mp * N if act == "gelu" else 0),
            bytes_accessed=int(4 * (Mp * K + K * N + N + (1 + has_gate + has_res) * Mp * N))),
    )(*operands)
    return out[:M]


def pallas_dwconv(x, w, b, *, act=None, res=None):
    """Depthwise 'same' conv. x:(B,H,W,C), w:(kh,kw,C), b:(C,)."""
    B, H, W, C = x.shape
    kh, kw, _ = w.shape
    ph, pw = kh // 2, kw // 2
    xp = jnp.pad(x, ((0, 0), (ph, ph), (pw, pw), (0, 0)))
    Hp, Wp = H + 2 * ph, W + 2 * pw

    operands = [xp, w, b.reshape(1, C)]
    in_specs = [
        pl.BlockSpec((1, Hp, Wp, C), lambda bi: (bi, 0, 0, 0)),
        pl.BlockSpec((kh, kw, C), lambda bi: (0, 0, 0)),
        pl.BlockSpec((1, C), lambda bi: (0, 0)),
    ]
    has_res = res is not None
    if has_res:
        operands.append(res)
        in_specs.append(pl.BlockSpec((1, H, W, C), lambda bi: (bi, 0, 0, 0)))

    return pl.pallas_call(
        functools.partial(_dwconv_kernel, kh=kh, kw=kw, H=H, W=W, act=act, has_res=has_res),
        out_shape=jax.ShapeDtypeStruct((B, H, W, C), jnp.float32),
        grid=(B,),
        in_specs=in_specs,
        out_specs=pl.BlockSpec((1, H, W, C), lambda bi: (bi, 0, 0, 0)),
        compiler_params=pltpu.CompilerParams(
            dimension_semantics=("parallel",), vmem_limit_bytes=_VMEM_LIMIT),
        cost_estimate=pl.CostEstimate(
            flops=int(2 * B * H * W * C * kh * kw),
            transcendentals=int(B * H * W * C if act == "gelu" else 0),
            bytes_accessed=int(4 * (B * Hp * Wp * C + kh * kw * C + C
                                    + (1 + has_res) * B * H * W * C))),
    )(*operands)


def pallas_affine(x, scale, shift, *, tm=128):
    """Per-channel y = x*scale + shift. x:(M,C)."""
    M, C = x.shape
    Mp = pl.cdiv(M, tm) * tm
    xp = x if Mp == M else jnp.pad(x, ((0, Mp - M), (0, 0)))
    out = pl.pallas_call(
        _affine_kernel,
        out_shape=jax.ShapeDtypeStruct((Mp, C), jnp.float32),
        grid=(Mp // tm,),
        in_specs=[pl.BlockSpec((tm, C), lambda m: (m, 0)),
                  pl.BlockSpec((1, C), lambda m: (0, 0)),
                  pl.BlockSpec((1, C), lambda m: (0, 0))],
        out_specs=pl.BlockSpec((tm, C), lambda m: (m, 0)),
        compiler_params=pltpu.CompilerParams(
            dimension_semantics=("parallel",), vmem_limit_bytes=_VMEM_LIMIT),
    )(xp, scale.reshape(1, C), shift.reshape(1, C))
    return out[:M]


def pallas_layernorm(x, gamma, beta, *, eps=1e-5, tm=128):
    """LayerNorm over channels. x:(B,H,W,C)."""
    B, H, W, C = x.shape
    M = B * H * W
    xf = x.reshape(M, C)
    Mp = pl.cdiv(M, tm) * tm
    xp = xf if Mp == M else jnp.pad(xf, ((0, Mp - M), (0, 0)))
    out = pl.pallas_call(
        functools.partial(_ln_kernel, eps=eps),
        out_shape=jax.ShapeDtypeStruct((Mp, C), jnp.float32),
        grid=(Mp // tm,),
        in_specs=[pl.BlockSpec((tm, C), lambda m: (m, 0)),
                  pl.BlockSpec((1, C), lambda m: (0, 0)),
                  pl.BlockSpec((1, C), lambda m: (0, 0))],
        out_specs=pl.BlockSpec((tm, C), lambda m: (m, 0)),
        compiler_params=pltpu.CompilerParams(
            dimension_semantics=("parallel",), vmem_limit_bytes=_VMEM_LIMIT),
    )(xp, gamma.reshape(1, C), beta.reshape(1, C))
    return out[:M].reshape(B, H, W, C)


# ---------------------------------------------------------------------------
# MSCAN forward (Pallas)
# ---------------------------------------------------------------------------
def _im2col(x, k, stride, pad):
    """NHWC im2col (XLA-side data movement; FLOPs go to the Pallas matmul)."""
    B, H, W, C = x.shape
    Ho = (H + 2 * pad - k) // stride + 1
    Wo = (W + 2 * pad - k) // stride + 1
    xp = jnp.pad(x, ((0, 0), (pad, pad), (pad, pad), (0, 0)))
    cols = []
    for i in range(k):
        for j in range(k):
            cols.append(xp[:, i:i + stride * (Ho - 1) + 1:stride,
                           j:j + stride * (Wo - 1) + 1:stride, :])
    return jnp.concatenate(cols, axis=-1), Ho, Wo


def _conv_bn_pallas(x, w, b, bn_s, bn_t, *, act=None):
    """k x k stride-2 conv (pad 1) + eval-BN (folded) [+ GELU], via im2col + Pallas matmul."""
    B = x.shape[0]
    k = w.shape[0]
    cout = w.shape[-1]
    cols, Ho, Wo = _im2col(x, k, 2, 1)
    wf = w.reshape(-1, cout) * bn_s[None, :]
    bf = b * bn_s + bn_t
    y = pallas_matmul(cols.reshape(-1, cols.shape[-1]), wf, bf, act=act)
    return y.reshape(B, Ho, Wo, cout)


def _block_forward_pallas(p, x):
    B, H, W, C = x.shape
    xf = x.reshape(B * H * W, C)

    # ---- spatial-attention branch: x += ls1 * (proj2(conv3(MSCA(h)) * h) + bn1(x)),
    #      h = gelu(proj1(bn1(x)))    (bn1 folded into proj1)
    w_p1 = p["bn1_s"][:, None] * p["proj1_w"]
    b_p1 = p["bn1_t"] @ p["proj1_w"] + p["proj1_b"]
    h = pallas_matmul(xf, w_p1, b_p1, act="gelu").reshape(B, H, W, C)

    a = pallas_dwconv(h, p["conv0_w"], p["conv0_b"])                     # 5x5 dw
    t = pallas_dwconv(a, p["conv0_1_w"], p["conv0_1_b"])                 # 1x7
    acc = pallas_dwconv(t, p["conv0_2_w"], p["conv0_2_b"], res=a)        # 7x1  (+ a)
    t = pallas_dwconv(a, p["conv1_1_w"], p["conv1_1_b"])                 # 1x11
    acc = pallas_dwconv(t, p["conv1_2_w"], p["conv1_2_b"], res=acc)      # 11x1 (+)
    t = pallas_dwconv(a, p["conv2_1_w"], p["conv2_1_b"])                 # 1x21
    acc = pallas_dwconv(t, p["conv2_2_w"], p["conv2_2_b"], res=acc)      # 21x1 (+)

    gated = pallas_matmul(acc.reshape(-1, C), p["conv3_w"], p["conv3_b"],
                          gate=h.reshape(-1, C))                         # conv3 (1x1) * u
    # residual term r = x + ls1 * bn1(x)  -> single per-channel affine of x
    r = pallas_affine(xf, 1.0 + p["ls1"] * p["bn1_s"], p["ls1"] * p["bn1_t"])
    w_p2 = p["proj2_w"] * p["ls1"][None, :]
    b_p2 = p["proj2_b"] * p["ls1"]
    xf = pallas_matmul(gated, w_p2, b_p2, res=r)                         # proj2 (ls1 folded)

    # ---- MLP branch: x += ls2 * fc2(gelu(dw3x3(fc1(bn2(x)))))   (bn2 folded into fc1)
    hidden = p["fc1_w"].shape[1]
    w_f1 = p["bn2_s"][:, None] * p["fc1_w"]
    b_f1 = p["bn2_t"] @ p["fc1_w"] + p["fc1_b"]
    hm = pallas_matmul(xf, w_f1, b_f1).reshape(B, H, W, hidden)
    hm = pallas_dwconv(hm, p["dw_w"], p["dw_b"], act="gelu")
    w_f2 = p["fc2_w"] * p["ls2"][None, :]
    b_f2 = p["fc2_b"] * p["ls2"]
    xf = pallas_matmul(hm.reshape(-1, hidden), w_f2, b_f2, res=xf)       # fc2 (ls2 folded)
    return xf.reshape(B, H, W, C)


def mscan_forward_pallas(params, x_nchw):
    x = jnp.transpose(x_nchw, (0, 2, 3, 1)).astype(jnp.float32)          # NHWC
    outs = []
    for stage in params["stages"]:
        p = stage["patch"]
        if p["kind"] == "stem":
            x = _conv_bn_pallas(x, p["w1"], p["b1"], p["bn1_s"], p["bn1_t"], act="gelu")
            x = _conv_bn_pallas(x, p["w2"], p["b2"], p["bn2_s"], p["bn2_t"])
        else:
            x = _conv_bn_pallas(x, p["w"], p["b"], p["bn_s"], p["bn_t"])
        for blk in stage["blocks"]:
            x = _block_forward_pallas(blk, x)
        x = pallas_layernorm(x, stage["ln_g"], stage["ln_b"])
        outs.append(jnp.transpose(x, (0, 3, 1, 2)))                      # back to NCHW
    return outs


# ---------------------------------------------------------------------------
# Parameter init (eval-mode BN stored as per-channel scale/shift)
# ---------------------------------------------------------------------------
def init_mscan_params(key, *, in_channels=3, embed_dims=(32, 64), mlp_ratios=(4, 4),
                      depths=(1, 1)):
    keys = iter(jax.random.split(key, 1024))
    nxt = lambda: next(keys)

    def conv_w(kh, kw, cin, cout, groups=1):
        fan_out = kh * kw * cout // groups
        std = math.sqrt(2.0 / fan_out)
        w = std * jax.random.normal(nxt(), (kh, kw, cin // groups, cout), jnp.float32)
        b = 0.02 * jax.random.normal(nxt(), (cout,), jnp.float32)
        return w, b

    def bn(c):
        s = 1.0 + 0.1 * jax.random.normal(nxt(), (c,), jnp.float32)
        t = 0.02 * jax.random.normal(nxt(), (c,), jnp.float32)
        return s, t

    stages = []
    prev_c = in_channels
    for si, c in enumerate(embed_dims):
        if si == 0:  # StemConv(3, embed_dims[0])
            w1, b1 = conv_w(3, 3, in_channels, c // 2)
            s1, t1 = bn(c // 2)
            w2, b2 = conv_w(3, 3, c // 2, c)
            s2, t2 = bn(c)
            patch = dict(kind="stem", w1=w1, b1=b1, bn1_s=s1, bn1_t=t1,
                         w2=w2, b2=b2, bn2_s=s2, bn2_t=t2)
        else:        # OverlapPatchEmbed(3, stride 2)
            w0, b0 = conv_w(3, 3, prev_c, c)
            s0, t0 = bn(c)
            patch = dict(kind="embed", w=w0, b=b0, bn_s=s0, bn_t=t0)

        blocks = []
        hidden = int(c * mlp_ratios[si])
        for _ in range(depths[si]):
            blk = {}
            blk["bn1_s"], blk["bn1_t"] = bn(c)
            blk["bn2_s"], blk["bn2_t"] = bn(c)
            blk["ls1"] = 0.01 * jnp.ones((c,), jnp.float32)
            blk["ls2"] = 0.01 * jnp.ones((c,), jnp.float32)
            w, b_ = conv_w(1, 1, c, c); blk["proj1_w"] = w.reshape(c, c); blk["proj1_b"] = b_
            w, b_ = conv_w(1, 1, c, c); blk["proj2_w"] = w.reshape(c, c); blk["proj2_b"] = b_
            w, b_ = conv_w(1, 1, c, c); blk["conv3_w"] = w.reshape(c, c); blk["conv3_b"] = b_
            for name, (kh, kw) in [("conv0", (5, 5)), ("conv0_1", (1, 7)), ("conv0_2", (7, 1)),
                                   ("conv1_1", (1, 11)), ("conv1_2", (11, 1)),
                                   ("conv2_1", (1, 21)), ("conv2_2", (21, 1))]:
                w, b_ = conv_w(kh, kw, c, c, groups=c)
                blk[name + "_w"] = w.reshape(kh, kw, c)
                blk[name + "_b"] = b_
            w, b_ = conv_w(1, 1, c, hidden); blk["fc1_w"] = w.reshape(c, hidden); blk["fc1_b"] = b_
            w, b_ = conv_w(3, 3, hidden, hidden, groups=hidden)
            blk["dw_w"] = w.reshape(3, 3, hidden); blk["dw_b"] = b_
            w, b_ = conv_w(1, 1, hidden, c); blk["fc2_w"] = w.reshape(hidden, c); blk["fc2_b"] = b_
            blocks.append(blk)

        ln_g = 1.0 + 0.1 * jax.random.normal(nxt(), (c,), jnp.float32)
        ln_b = 0.02 * jax.random.normal(nxt(), (c,), jnp.float32)
        stages.append(dict(patch=patch, blocks=blocks, ln_g=ln_g, ln_b=ln_b))
        prev_c = c
    return dict(stages=stages)


# ---------------------------------------------------------------------------
# Pure-JAX reference (unfused, XLA ops) for validation
# ---------------------------------------------------------------------------
_HI = jax.lax.Precision.HIGHEST


def _conv_ref(x, w, b, stride, pad):
    y = lax.conv_general_dilated(
        x, w, window_strides=(stride, stride), padding=((pad, pad), (pad, pad)),
        dimension_numbers=("NHWC", "HWIO", "NHWC"), precision=_HI)
    return y + b


def _dwconv_ref(x, w, b):
    kh, kw, C = w.shape
    y = lax.conv_general_dilated(
        x, w.reshape(kh, kw, 1, C), window_strides=(1, 1),
        padding=((kh // 2, kh // 2), (kw // 2, kw // 2)),
        dimension_numbers=("NHWC", "HWIO", "NHWC"),
        feature_group_count=C, precision=_HI)
    return y + b


def _block_forward_ref(p, x):
    n1 = x * p["bn1_s"] + p["bn1_t"]
    h = _gelu(jnp.einsum("bhwc,cd->bhwd", n1, p["proj1_w"], precision=_HI) + p["proj1_b"])
    a = _dwconv_ref(h, p["conv0_w"], p["conv0_b"])
    a0 = _dwconv_ref(_dwconv_ref(a, p["conv0_1_w"], p["conv0_1_b"]), p["conv0_2_w"], p["conv0_2_b"])
    a1 = _dwconv_ref(_dwconv_ref(a, p["conv1_1_w"], p["conv1_1_b"]), p["conv1_2_w"], p["conv1_2_b"])
    a2 = _dwconv_ref(_dwconv_ref(a, p["conv2_1_w"], p["conv2_1_b"]), p["conv2_2_w"], p["conv2_2_b"])
    attn = a + a0 + a1 + a2
    attn = jnp.einsum("bhwc,cd->bhwd", attn, p["conv3_w"], precision=_HI) + p["conv3_b"]
    g = attn * h
    sp = jnp.einsum("bhwc,cd->bhwd", g, p["proj2_w"], precision=_HI) + p["proj2_b"] + n1
    x = x + p["ls1"] * sp
    n2 = x * p["bn2_s"] + p["bn2_t"]
    hm = jnp.einsum("bhwc,cd->bhwd", n2, p["fc1_w"], precision=_HI) + p["fc1_b"]
    hm = _gelu(_dwconv_ref(hm, p["dw_w"], p["dw_b"]))
    m = jnp.einsum("bhwc,cd->bhwd", hm, p["fc2_w"], precision=_HI) + p["fc2_b"]
    x = x + p["ls2"] * m
    return x


def mscan_forward_reference(params, x_nchw):
    x = jnp.transpose(x_nchw, (0, 2, 3, 1)).astype(jnp.float32)
    outs = []
    for stage in params["stages"]:
        p = stage["patch"]
        if p["kind"] == "stem":
            x = _conv_ref(x, p["w1"], p["b1"], 2, 1)
            x = _gelu(x * p["bn1_s"] + p["bn1_t"])
            x = _conv_ref(x, p["w2"], p["b2"], 2, 1)
            x = x * p["bn2_s"] + p["bn2_t"]
        else:
            x = _conv_ref(x, p["w"], p["b"], 2, 1)
            x = x * p["bn_s"] + p["bn_t"]
        for blk in stage["blocks"]:
            x = _block_forward_ref(blk, x)
        mu = jnp.mean(x, axis=-1, keepdims=True)
        var = jnp.mean((x - mu) ** 2, axis=-1, keepdims=True)
        x = (x - mu) / jnp.sqrt(var + 1e-5) * stage["ln_g"] + stage["ln_b"]
        outs.append(jnp.transpose(x, (0, 3, 1, 2)))
    return outs


# ---------------------------------------------------------------------------
if __name__ == "__main__":
    key = jax.random.PRNGKey(0)
    k_params, k_x = jax.random.split(key)

    # Small MSCAN config: 2 stages, depth 1 each, embed dims (32, 64), mlp ratio 4.
    params = init_mscan_params(k_params, in_channels=3, embed_dims=(32, 64),
                               mlp_ratios=(4, 4), depths=(1, 1))
    x = jax.random.normal(k_x, (2, 3, 64, 64), dtype=jnp.float32)

    outs = mscan_forward_pallas(params, x)
    outs = jax.block_until_ready(outs)

    assert len(outs) == 2
    assert outs[0].shape == (2, 32, 16, 16), outs[0].shape
    assert outs[1].shape == (2, 64, 8, 8), outs[1].shape

    refs = mscan_forward_reference(params, x)
    refs = jax.block_until_ready(refs)
    for o, r in zip(outs, refs):
        err = float(jnp.max(jnp.abs(o - r)))
        assert jnp.allclose(o, r, atol=1e-3, rtol=1e-3), err

    print("KERNEL_OK")
</pallas_src>

<mosaic_0001>
module attributes {stable_mosaic.version = 11 : i64} {
  func.func @_matmul_kernel(%arg0: i32, %arg1: memref<128x27xf32, #tpu.memory_space<vmem>>, %arg2: memref<27x16xf32, #tpu.memory_space<vmem>>, %arg3: memref<1x16xf32, #tpu.memory_space<vmem>>, %arg4: memref<128x16xf32, #tpu.memory_space<vmem>>) attributes {dimension_semantics = [#tpu.dimension_semantics<parallel>], iteration_bounds = array<i64: 16>, scalar_prefetch = 0 : i64, scratch_operands = 0 : i64, tpu.core_type = #tpu.core_type<tc>, window_params = [{transform_indices = @transform_0, window_bounds = array<i64: 128, 27>}, {pipeline_mode = #tpu.pipeline_mode<synchronous>, transform_indices = @transform_1, window_bounds = array<i64: 27, 16>}, {pipeline_mode = #tpu.pipeline_mode<synchronous>, transform_indices = @transform_2, window_bounds = array<i64: 1, 16>}, {transform_indices = @transform_3, window_bounds = array<i64: 128, 16>}]} {
    %c0 = arith.constant 0 : index
    %c0_0 = arith.constant 0 : index
    %0 = vector.load %arg1[%c0, %c0_0] : memref<128x27xf32, #tpu.memory_space<vmem>>, vector<128x27xf32>
    %c0_1 = arith.constant 0 : index
    %c0_2 = arith.constant 0 : index
    %1 = vector.load %arg2[%c0_1, %c0_2] : memref<27x16xf32, #tpu.memory_space<vmem>>, vector<27x16xf32>
    %cst = arith.constant dense<0.000000e+00> : vector<128x16xf32>
    %2 = tpu.matmul %0, %1, %cst {dimension_numbers = #tpu.dot_dimension_numbers<[1], [0], [0], [1], [0, 0, 1, 1], [], []>} : vector<128x27xf32>, vector<27x16xf32>, vector<128x16xf32> -> vector<128x16xf32>
    %c0_3 = arith.constant 0 : index
    %c0_4 = arith.constant 0 : index
    %3 = vector.load %arg3[%c0_3, %c0_4] : memref<1x16xf32, #tpu.memory_space<vmem>>, vector<1x16xf32>
    %4 = vector.broadcast %3 : vector<1x16xf32> to vector<128x16xf32>
    %5 = arith.addf %2, %4 : vector<128x16xf32>
    %cst_5 = arith.constant 5.000000e-01 : f32
    %6 = vector.broadcast %cst_5 : f32 to vector<128x16xf32>
    %7 = arith.mulf %6, %5 : vector<128x16xf32>
    %cst_6 = arith.constant 4.471500e-02 : f32
    %8 = vector.broadcast %cst_6 : f32 to vector<128x16xf32>
    %9 = arith.mulf %8, %5 : vector<128x16xf32>
    %10 = arith.mulf %9, %5 : vector<128x16xf32>
    %11 = arith.mulf %10, %5 : vector<128x16xf32>
    %12 = arith.addf %5, %11 : vector<128x16xf32>
    %cst_7 = arith.constant 0.797884583 : f32
    %13 = vector.broadcast %cst_7 : f32 to vector<128x16xf32>
    %14 = arith.mulf %13, %12 : vector<128x16xf32>
    %15 = math.tanh %14 : vector<128x16xf32>
    %cst_8 = arith.constant 1.000000e+00 : f32
    %16 = vector.broadcast %cst_8 : f32 to vector<128x16xf32>
    %17 = arith.addf %16, %15 : vector<128x16xf32>
    %18 = arith.mulf %7, %17 : vector<128x16xf32>
    %c0_9 = arith.constant 0 : index
    %c0_10 = arith.constant 0 : index
    %19 = vector.load %arg4[%c0_9, %c0_10] : memref<128x16xf32, #tpu.memory_space<vmem>>, vector<128x16xf32>
    tpu.vector_store %arg4[%c0_9, %c0_10], %18 {strides = array<i32>} : memref<128x16xf32, #tpu.memory_space<vmem>>, vector<128x16xf32>,
    return
  }
  func.func @transform_0(%arg0: i32) -> (i32, i32) {
    %c0_i32 = arith.constant 0 : i32
    %c0_i32_0 = arith.constant 0 : i32
    return %arg0, %c0_i32 : i32, i32
  }
  func.func @transform_1(%arg0: i32) -> (i32, i32) {
    %c0_i32 = arith.constant 0 : i32
    %c0_i32_0 = arith.constant 0 : i32
    %c0_i32_1 = arith.constant 0 : i32
    return %c0_i32, %c0_i32_0 : i32, i32
  }
  func.func @transform_2(%arg0: i32) -> (i32, i32) {
    %c0_i32 = arith.constant 0 : i32
    %c0_i32_0 = arith.constant 0 : i32
    %c0_i32_1 = arith.constant 0 : i32
    return %c0_i32, %c0_i32_0 : i32, i32
  }
  func.func @transform_3(%arg0: i32) -> (i32, i32) {
    %c0_i32 = arith.constant 0 : i32
    %c0_i32_0 = arith.constant 0 : i32
    return %arg0, %c0_i32 : i32, i32
  }
}

</mosaic_0001>

<llo_original>
// kernel: tpu_custom_call.1
$region0: #{tpu_custom_call.1}
  #allocation0 [shape = 'u32[]', space=smem, size = 0x4, offset = 0x4, fixed_abs, tag = 'smem constant byte address 0x4 - core index']
  #allocation1 [shape = 'u32[144,128]{1,0:T(1,128)}', space=vmem, size = 0x12000, scoped, tag = 'internal scratch']
  %s0 = inlined_call_operand.vmem [shape: f32[2048,27], index: 0, kind: input, shape index: {}]
  %s1 = inlined_call_operand.vmem [shape: f32[27,16], index: 1, kind: input, shape index: {}]
  %s2 = inlined_call_operand.vmem [shape: f32[1,16], index: 2, kind: input, shape index: {}]
  %s3 = inlined_call_operand.vmem [shape: f32[2048,16], index: 3, kind: output, shape index: {}]
  %s4 = sld [smem:[#allocation0]]
  $region45: #{tpu_custom_call.1} parent=0
    _
  %s6 = ssub.s32 1, %s4
  %s7 = scalar_select 0, %s6, %s4
  loop: start=0, step=1, limit=18
  $region2: #{tpu_custom_call.1} parent=0 // loop_pre_header
    _
  $region3: #{tpu_custom_call.1} parent=0 // loop_header
    %s9 = sphi 0, %s13
    %p10 = scmp.ge.s32.totalorder %s9, 18
    %s19 = sphi 0, %s21
    %s22 = sphi 0, %s19
    %s23 = sphi 0, %s22
    %s39 = sphi 0, %s23
    %s43 = sphi 0, %s43
    %s45 = sphi 0, %s43
    %s46 = sphi 0, %s45
    %s60 = sphi 0, %s46
    %s64 = sphi 0, %s64
    %s66 = sphi 0, %s64
    %s67 = sphi 0, %s66
    %s81 = sphi 0, %s67
    %s87 = sphi 0, %s89
    %s90 = sphi 0, %s87
    %s91 = sphi 0, %s90
    %s107 = sphi 0, %s91
  $region4: #{tpu_custom_call.1} parent=0 // loop_header_branch
    %12 = sbr.rel (%p10) target = $region8
  $region5: #{tpu_custom_call.1} parent=0 // loop_body
    %s14 = ssub.s32 %s9, 1
    %s15 = ssub.s32 %s9, 2
    %s16 = sadd.s32 %s9, 1
    %s17 = ssub.s32 %s9, %s16
    %p18 = scmp.eq.s32.totalorder %s17, 0
    %s20 = sadd.s32 %s19, 1
    %s21 = scalar_select %p18, %s19, %s20
    %p24 = pneg %p18
    %p25 = scmp.eq.s32.totalorder %s9, 15
    %p26 = por %p24, %p25
    %p27 = scmp.ne.s32.totalorder %s19, %s22
    %p28 = scmp.eq.s32.totalorder %s9, 0
    %p29 = por %p27, %p28
    %p30 = scmp.ne.s32.totalorder %s19, %s22
    %p31 = scmp.eq.s32.totalorder %s14, 15
    %p32 = por %p30, %p31
    %p33 = scmp.ne.s32.totalorder %s22, %s23
    %p34 = scmp.eq.s32.totalorder %s14, 0
    %p35 = por %p33, %p34
    %p36 = scmp.ne.s32.totalorder %s22, %s23
    %p37 = scmp.eq.s32.totalorder %s15, 15
    %p38 = por %p36, %p37
    %p40 = scmp.ne.s32.totalorder %s23, %s39
    %p41 = scmp.eq.s32.totalorder %s15, 0
    %p42 = por %p40, %p41
    %s44 = sadd.s32 %s43, 1
    %p47 = scmp.eq.s32.totalorder %s9, 15
    %p48 = scmp.ne.s32.totalorder %s43, %s45
    %p49 = scmp.eq.s32.totalorder %s9, 0
    %p50 = por %p48, %p49
    %p51 = scmp.ne.s32.totalorder %s43, %s45
    %p52 = scmp.eq.s32.totalorder %s14, 15
    %p53 = por %p51, %p52
    %p54 = scmp.ne.s32.totalorder %s45, %s46
    %p55 = scmp.eq.s32.totalorder %s14, 0
    %p56 = por %p54, %p55
    %p57 = scmp.ne.s32.totalorder %s45, %s46
    %p58 = scmp.eq.s32.totalorder %s15, 15
    %p59 = por %p57, %p58
    %p61 = scmp.ne.s32.totalorder %s46, %s60
    %p62 = scmp.eq.s32.totalorder %s15, 0
    %p63 = por %p61, %p62
    %s65 = sadd.s32 %s64, 1
    %p68 = scmp.eq.s32.totalorder %s9, 15
    %p69 = scmp.ne.s32.totalorder %s64, %s66
    %p70 = scmp.eq.s32.totalorder %s9, 0
    %p71 = por %p69, %p70
    %p72 = scmp.ne.s32.totalorder %s64, %s66
    %p73 = scmp.eq.s32.totalorder %s14, 15
    %p74 = por %p72, %p73
    %p75 = scmp.ne.s32.totalorder %s66, %s67
    %p76 = scmp.eq.s32.totalorder %s14, 0
    %p77 = por %p75, %p76
    %p78 = scmp.ne.s32.totalorder %s66, %s67
    %p79 = scmp.eq.s32.totalorder %s15, 15
    %p80 = por %p78, %p79
    %p82 = scmp.ne.s32.totalorder %s67, %s81
    %p83 = scmp.eq.s32.totalorder %s15, 0
    %p84 = por %p82, %p83
    %s85 = ssub.s32 %s9, %s16
    %p86 = scmp.eq.s32.totalorder %s85, 0
    %s88 = sadd.s32 %s87, 1
    %s89 = scalar_select %p86, %s87, %s88
    %p92 = pneg %p86
    %p93 = scmp.eq.s32.totalorder %s9, 15
    %p94 = por %p92, %p93
    %p95 = scmp.ne.s32.totalorder %s87, %s90
    %p96 = scmp.eq.s32.totalorder %s9, 0
    %p97 = por %p95, %p96
    %p98 = scmp.ne.s32.totalorder %s87, %s90
    %p99 = scmp.eq.s32.totalorder %s14, 15
    %p100 = por %p98, %p99
    %p101 = scmp.ne.s32.totalorder %s90, %s91
    %p102 = scmp.eq.s32.totalorder %s14, 0
    %p103 = por %p101, %p102
    %p104 = scmp.ne.s32.totalorder %s90, %s91
    %p105 = scmp.eq.s32.totalorder %s15, 15
    %p106 = por %p104, %p105
    %p108 = scmp.ne.s32.totalorder %s91, %s107
    %p109 = scmp.eq.s32.totalorder %s15, 0
    %p110 = por %p108, %p109
    %p111 = scmp.le.s32.totalorder 1, %s9
    %p112 = scmp.lt.s32.totalorder %s9, 17
    %p113 = pnand %p111, %p112
    %p114 = pneg %p113
    // Predicated region
    $region9: #{tpu_custom_call.1} parent=5 // pred_check
      _
    $region10: #{tpu_custom_call.1} parent=5 // pred_check_branch
      %116 = sbr.rel (%p113) target = $region12
    $region11: #{tpu_custom_call.1} parent=5 // pred_region
      %s117 = ssub.s32 %s9, 1
      // Predicated region
      $region13: #{tpu_custom_call.1} parent=11 // pred_check
        %p118 = pneg %p56
      $region14: #{tpu_custom_call.1} parent=11 // pred_check_branch
        %120 = sbr.rel (%p118) target = $region16
      $region15: #{tpu_custom_call.1} parent=11 // pred_region
        _
      $region16: #{tpu_custom_call.1} parent=11 // pred_fallthru
        _
      // Predicated region
      $region17: #{tpu_custom_call.1} parent=11 // pred_check
        %p121 = pneg %p77
      $region18: #{tpu_custom_call.1} parent=11 // pred_check_branch
        %123 = sbr.rel (%p121) target = $region20
      $region19: #{tpu_custom_call.1} parent=11 // pred_region
        _
      $region20: #{tpu_custom_call.1} parent=11 // pred_fallthru
        _
    $region12: #{tpu_custom_call.1} parent=5 // pred_fallthru
      _
    %p124 = scmp.lt.s32.totalorder %s9, 16
    // Predicated region
    $region21: #{tpu_custom_call.1} parent=5 // pred_check
      %p125 = pneg %p124
    $region22: #{tpu_custom_call.1} parent=5 // pred_check_branch
      %127 = sbr.rel (%p125) target = $region24
    $region23: #{tpu_custom_call.1} parent=5 // pred_region
      // Predicated region
      $region25: #{tpu_custom_call.1} parent=23 // pred_check
        %p128 = pneg %p29
      $region26: #{tpu_custom_call.1} parent=23 // pred_check_branch
        %130 = sbr.rel (%p128) target = $region28
      $region27: #{tpu_custom_call.1} parent=23 // pred_region
        %s131 = smul.u32 16, %s9
        %p132 = scmp.lt.s32.totalorder %s131, 255
        %s133 = scalar_select %p132, %s131, 255
        %s134 = smul.addr %s133, 8
        %s135 = scalar_lea.vmem %s0, %s134
        %s136 = smul.u32 16, %s9
      $region28: #{tpu_custom_call.1} parent=23 // pred_fallthru
        _
    $region24: #{tpu_custom_call.1} parent=5 // pred_fallthru
      _
    %p137 = scmp.le.s32.totalorder 1, %s9
    %p138 = scmp.lt.s32.totalorder %s9, 17
    %p139 = pnand %p137, %p138
    %p140 = pneg %p139
    // Predicated region
    $region29: #{tpu_custom_call.1} parent=5 // pred_check
      _
    $region30: #{tpu_custom_call.1} parent=5 // pred_check_branch
      %142 = sbr.rel (%p139) target = $region32
    $region31: #{tpu_custom_call.1} parent=5 // pred_region
      %s143 = ssub.s32 %s9, 1
      %s144 = smul.u32 16, %s14
      %p145 = scmp.lt.s32.totalorder %s144, 255
      %s146 = scalar_select %p145, %s144, 255
      %s147 = smul.addr %s146, 8
      %s148 = scalar_lea.vmem %s0, %s147
      %p149 = pneg %p35
      %p150 = pneg %p32
      %p151 = pneg %p56
      %p152 = pneg %p53
      %p153 = pneg %p77
      %p154 = pneg %p74
      %p155 = pneg %p103
      %p156 = pneg %p100
      %s157 = smul.u32 16, %s14
      %p158 = scmp.lt.s32.totalorder %s157, 255
      %s159 = scalar_select %p158, %s157, 255
      %s160 = smul.addr %s159, 8
      %s161 = scalar_lea.vmem %s3, %s160
      %s162 = smul.u32 16, %s14
      %p163 = scmp.lt.s32.totalorder %s162, 255
      %s164 = scalar_select %p163, %s162, 255
      %s165 = smul.addr %s164, 8
      %s166 = scalar_lea.vmem %s0, %s165
      %s167 = smul.u32 16, %s14
      %s168 = smul.u32 16, %s14
      %p169 = scmp.lt.s32.totalorder %s168, 255
      %s170 = scalar_select %p169, %s168, 255
      %s171 = smul.addr %s170, 8
      %s172 = scalar_lea.vmem %s3, %s171
      %s173 = smul.u32 16, %s14
      %v174 = vld [vmem:[%s166] sm:$0xff]
      %v175 = vld [vmem:[%s166 + $0x8] sm:$0xff]
      %v176 = vld [vmem:[%s166 + $0x10] sm:$0xff]
      %v177 = vld [vmem:[%s166 + $0x18] sm:$0xff]
      %v178 = vld [vmem:[%s166 + $0x20] sm:$0xff]
      %v179 = vld [vmem:[%s166 + $0x28] sm:$0xff]
      %v180 = vld [vmem:[%s166 + $0x30] sm:$0xff]
      %v181 = vld [vmem:[%s166 + $0x38] sm:$0xff]
      %v182 = vld [vmem:[%s166 + $0x40] sm:$0xff]
      %v183 = vld [vmem:[%s166 + $0x48] sm:$0xff]
      %v184 = vld [vmem:[%s166 + $0x50] sm:$0xff]
      %v185 = vld [vmem:[%s166 + $0x58] sm:$0xff]
      %v186 = vld [vmem:[%s166 + $0x60] sm:$0xff]
      %v187 = vld [vmem:[%s166 + $0x68] sm:$0xff]
      %v188 = vld [vmem:[%s166 + $0x70] sm:$0xff]
      %v189 = vld [vmem:[%s166 + $0x78] sm:$0xff]
      %v190 = vld [vmem:[%s1] sm:$0xff]
      %v191 = vld [vmem:[%s1 + $0x8] sm:$0xff]
      %v192 = vld [vmem:[%s1 + $0x10] sm:$0xff]
      %v193 = vld [vmem:[%s1 + $0x18] sm:$0x7]
      %v194 = vld [vmem:[%s2] sm:$0x1]
      %v196 = vlaneseq
      %v197 = vshrl.u32 %v196, 7
      %v198 = vsub.s32 0, %v197
      %v199 = vrot.slane %v194, %v198
      %vm201 = vcmask 220160
      %v203 = vsel %vm201, %v174, 0
      %v206 = vsel %vm201, %v175, 0
      %v209 = vsel %vm201, %v176, 0
      %v212 = vsel %vm201, %v177, 0
      %v215 = vsel %vm201, %v178, 0
      %v218 = vsel %vm201, %v179, 0
      %v221 = vsel %vm201, %v180, 0
      %v224 = vsel %vm201, %v181, 0
      %v227 = vsel %vm201, %v182, 0
      %v230 = vsel %vm201, %v183, 0
      %v233 = vsel %vm201, %v184, 0
      %v236 = vsel %vm201, %v185, 0
      %v239 = vsel %vm201, %v186, 0
      %v242 = vsel %vm201, %v187, 0
      %v245 = vsel %vm201, %v188, 0
      %v248 = vsel %vm201, %v189, 0
      %vm250 = vcmask 1042432
      %v252 = vsel %vm250, %v193, 0
      %254 = vmatprep.subr.mxu0 0.0
      %255 = vmatpush1.msra.mxu0 0.0
      %256 = vmatprep.subr.mxu0 0.0
      %257 = vmatpush1.msra.mxu0 0.0
      %258 = vmatprep.subr.mxu0 0.0
      %259 = vmatpush1.msra.mxu0 0.0
      %260 = vmatprep.subr.mxu0 0.0
      %261 = vmatpush1.msra.mxu0 0.0
      %262 = vmatprep.subr.mxu0 0.0
      %263 = vmatpush1.msra.mxu0 0.0
      %264 = vmatprep.subr.mxu0 0.0
      %265 = vmatpush1.msra.mxu0 0.0
      %266 = vmatprep.subr.mxu0 0.0
      %267 = vmatpush1.msra.mxu0 0.0
      %268 = vmatprep.subr.mxu0 0.0
      %269 = vmatpush1.msra.mxu0 0.0
      %270 = vmatprep.subr.mxu0 0.0
      %271 = vmatpush1.msra.mxu0 0.0
      %272 = vmatprep.subr.mxu0 0.0
      %273 = vmatpush1.msra.mxu0 0.0
      %274 = vmatprep.subr.mxu0 0.0
      %275 = vmatpush1.msra.mxu0 0.0
      %276 = vmatprep.subr.mxu0 0.0
      %277 = vmatpush1.msra.mxu0 0.0
      %278 = vmatprep.subr.mxu0 0.0
      %279 = vmatpush1.msra.mxu0 %v252
      %280 = vmatprep.subr.mxu0 0.0
      %281 = vmatpush1.msra.mxu0 %v192
      %282 = vmatprep.subr.mxu0 0.0
      %283 = vmatpush1.msra.mxu0 %v191
      %284 = vmatprep.subr.mxu0 0.0
      %285 = vmatpush1.msra.mxu0 %v190
      %286 = vmatprep.subr.mxu0 0.0
      %287 = vmatpush2.msra.mxu0 0.0
      %288 = vmatprep.subr.mxu0 0.0
      %289 = vmatpush2.msra.mxu0 0.0
      %290 = vmatprep.subr.mxu0 0.0
      %291 = vmatpush2.msra.mxu0 0.0
      %292 = vmatprep.subr.mxu0 0.0
      %293 = vmatpush2.msra.mxu0 0.0
      %294 = vmatprep.subr.mxu0 0.0
      %295 = vmatpush2.msra.mxu0 0.0
      %296 = vmatprep.subr.mxu0 0.0
      %297 = vmatpush2.msra.mxu0 0.0
      %298 = vmatprep.subr.mxu0 0.0
      %299 = vmatpush2.msra.mxu0 0.0
      %300 = vmatprep.subr.mxu0 0.0
      %301 = vmatpush2.msra.mxu0 0.0
      %302 = vmatprep.subr.mxu0 0.0
      %303 = vmatpush2.msra.mxu0 0.0
      %304 = vmatprep.subr.mxu0 0.0
      %305 = vmatpush2.msra.mxu0 0.0
      %306 = vmatprep.subr.mxu0 0.0
      %307 = vmatpush2.msra.mxu0 0.0
      %308 = vmatprep.subr.mxu0 0.0
      %309 = vmatpush2.msra.mxu0 0.0
      %310 = vmatprep.subr.mxu0 0.0
      %311 = vmatpush2.msra.mxu0 0.0
      %312 = vmatprep.subr.mxu0 0.0
      %313 = vmatpush2.msra.mxu0 0.0
      %314 = vmatprep.subr.mxu0 0.0
      %315 = vmatpush2.msra.mxu0 0.0
      %316 = vmatprep.subr.mxu0 0.0
      %317 = vmatpush2.msra.mxu0 0.0
      %318 = vmatprep.mubr.f32.mxu0 0.0
      %319 = vmatmul.mubr.f32.gmra.mxu0 %v203
      %v320 = vpop.f32.mrf.mxu0
      %v321 = vadd.f32 %v199, %v320
      %v322 = vpop.f32.mrf.mxu0
      %323 = vmatprep.mubr.f32.mxu0 0.0
      %324 = vmatmul.mubr.f32.gmra.mxu0 %v206
      %v325 = vpop.f32.mrf.mxu0
      %v326 = vadd.f32 %v199, %v325
      %v327 = vpop.f32.mrf.mxu0
      %328 = vmatprep.mubr.f32.mxu0 0.0
      %329 = vmatmul.mubr.f32.gmra.mxu0 %v209
      %v330 = vpop.f32.mrf.mxu0
      %v331 = vadd.f32 %v199, %v330
      %v332 = vpop.f32.mrf.mxu0
      %333 = vmatprep.mubr.f32.mxu0 0.0
      %334 = vmatmul.mubr.f32.gmra.mxu0 %v212
      %v335 = vpop.f32.mrf.mxu0
      %v336 = vadd.f32 %v199, %v335
      %v337 = vpop.f32.mrf.mxu0
      %338 = vmatprep.mubr.f32.mxu0 0.0
      %339 = vmatmul.mubr.f32.gmra.mxu0 %v215
      %v340 = vpop.f32.mrf.mxu0
      %v341 = vadd.f32 %v199, %v340
      %v342 = vpop.f32.mrf.mxu0
      %343 = vmatprep.mubr.f32.mxu0 0.0
      %344 = vmatmul.mubr.f32.gmra.mxu0 %v218
      %v345 = vpop.f32.mrf.mxu0
      %v346 = vadd.f32 %v199, %v345
      %v347 = vpop.f32.mrf.mxu0
      %348 = vmatprep.mubr.f32.mxu0 0.0
      %349 = vmatmul.mubr.f32.gmra.mxu0 %v221
      %v350 = vpop.f32.mrf.mxu0
      %v351 = vadd.f32 %v199, %v350
      %v352 = vpop.f32.mrf.mxu0
      %353 = vmatprep.mubr.f32.mxu0 0.0
      %354 = vmatmul.mubr.f32.gmra.mxu0 %v224
      %v355 = vpop.f32.mrf.mxu0
      %v356 = vadd.f32 %v199, %v355
      %v357 = vpop.f32.mrf.mxu0
      %358 = vmatprep.mubr.f32.mxu0 0.0
      %359 = vmatmul.mubr.f32.gmra.mxu0 %v227
      %v360 = vpop.f32.mrf.mxu0
      %v361 = vadd.f32 %v199, %v360
      %v362 = vpop.f32.mrf.mxu0
      %363 = vmatprep.mubr.f32.mxu0 0.0
      %364 = vmatmul.mubr.f32.gmra.mxu0 %v230
      %v365 = vpop.f32.mrf.mxu0
      %v366 = vadd.f32 %v199, %v365
      %v367 = vpop.f32.mrf.mxu0
      %368 = vmatprep.mubr.f32.mxu0 0.0
      %369 = vmatmul.mubr.f32.gmra.mxu0 %v233
      %v370 = vpop.f32.mrf.mxu0
      %v371 = vadd.f32 %v199, %v370
      %v372 = vpop.f32.mrf.mxu0
      %373 = vmatprep.mubr.f32.mxu0 0.0
      %374 = vmatmul.mubr.f32.gmra.mxu0 %v236
      %v375 = vpop.f32.mrf.mxu0
      %v376 = vadd.f32 %v199, %v375
      %v377 = vpop.f32.mrf.mxu0
      %378 = vmatprep.mubr.f32.mxu0 0.0
      %379 = vmatmul.mubr.f32.gmra.mxu0 %v239
      %v380 = vpop.f32.mrf.mxu0
      %v381 = vadd.f32 %v199, %v380
      %v382 = vpop.f32.mrf.mxu0
      %383 = vmatprep.mubr.f32.mxu0 0.0
      %384 = vmatmul.mubr.f32.gmra.mxu0 %v242
      %v385 = vpop.f32.mrf.mxu0
      %v386 = vadd.f32 %v199, %v385
      %v387 = vpop.f32.mrf.mxu0
      %388 = vmatprep.mubr.f32.mxu0 0.0
      %389 = vmatmul.mubr.f32.gmra.mxu0 %v245
      %v390 = vpop.f32.mrf.mxu0
      %v391 = vadd.f32 %v199, %v390
      %v392 = vpop.f32.mrf.mxu0
      %393 = vmatprep.mubr.f32.mxu0 0.0
      %394 = vmatmul.mubr.f32.gmra.mxu0 %v248
      %v395 = vpop.f32.mrf.mxu0
      %v396 = vadd.f32 %v199, %v395
      %v397 = vpop.f32.mrf.mxu0
      %398 = vdwg.mxu0
      %v399 = vmul.f32 %v321, 0.5
      %v400 = vmul.f32 %v326, 0.5
      %v401 = vmul.f32 %v331, 0.5
      %v402 = vmul.f32 %v336, 0.5
      %v403 = vmul.f32 %v341, 0.5
      %v404 = vmul.f32 %v346, 0.5
      %v405 = vmul.f32 %v351, 0.5
      %v406 = vmul.f32 %v356, 0.5
      %v407 = vmul.f32 %v361, 0.5
      %v408 = vmul.f32 %v366, 0.5
      %v409 = vmul.f32 %v371, 0.5
      %v410 = vmul.f32 %v376, 0.5
      %v411 = vmul.f32 %v381, 0.5
      %v412 = vmul.f32 %v386, 0.5
      %v413 = vmul.f32 %v391, 0.5
      %v414 = vmul.f32 %v396, 0.5
      %v415 = vmul.f32 %v321, 0.044715
      %v416 = vmul.f32 %v326, 0.044715
      %v417 = vmul.f32 %v331, 0.044715
      %v418 = vmul.f32 %v336, 0.044715
      %v419 = vmul.f32 %v341, 0.044715
      %v420 = vmul.f32 %v346, 0.044715
      %v421 = vmul.f32 %v351, 0.044715
      %v422 = vmul.f32 %v356, 0.044715
      %v423 = vmul.f32 %v361, 0.044715
      %v424 = vmul.f32 %v366, 0.044715
      %v425 = vmul.f32 %v371, 0.044715
      %v426 = vmul.f32 %v376, 0.044715
      %v427 = vmul.f32 %v381, 0.044715
      %v428 = vmul.f32 %v386, 0.044715
      %v429 = vmul.f32 %v391, 0.044715
      %v430 = vmul.f32 %v396, 0.044715
      %v431 = vmul.f32 %v415, %v321
      %v432 = vmul.f32 %v416, %v326
      %v433 = vmul.f32 %v417, %v331
      %v434 = vmul.f32 %v418, %v336
      %v435 = vmul.f32 %v419, %v341
      %v436 = vmul.f32 %v420, %v346
      %v437 = vmul.f32 %v421, %v351
      %v438 = vmul.f32 %v422, %v356
      %v439 = vmul.f32 %v423, %v361
      %v440 = vmul.f32 %v424, %v366
      %v441 = vmul.f32 %v425, %v371
      %v442 = vmul.f32 %v426, %v376
      %v443 = vmul.f32 %v427, %v381
      %v444 = vmul.f32 %v428, %v386
      %v445 = vmul.f32 %v429, %v391
      %v446 = vmul.f32 %v430, %v396
      %v447 = vmul.f32 %v431, %v321
      %v448 = vmul.f32 %v432, %v326
      %v449 = vmul.f32 %v433, %v331
      %v450 = vmul.f32 %v434, %v336
      %v451 = vmul.f32 %v435, %v341
      %v452 = vmul.f32 %v436, %v346
      %v453 = vmul.f32 %v437, %v351
      %v454 = vmul.f32 %v438, %v356
      %v455 = vmul.f32 %v439, %v361
      %v456 = vmul.f32 %v440, %v366
      %v457 = vmul.f32 %v441, %v371
      %v458 = vmul.f32 %v442, %v376
      %v459 = vmul.f32 %v443, %v381
      %v460 = vmul.f32 %v444, %v386
      %v461 = vmul.f32 %v445, %v391
      %v462 = vmul.f32 %v446, %v396
      %v463 = vadd.f32 %v321, %v447
      %v464 = vadd.f32 %v326, %v448
      %v465 = vadd.f32 %v331, %v449
      %v466 = vadd.f32 %v336, %v450
      %v467 = vadd.f32 %v341, %v451
      %v468 = vadd.f32 %v346, %v452
      %v469 = vadd.f32 %v351, %v453
      %v470 = vadd.f32 %v356, %v454
      %v471 = vadd.f32 %v361, %v455
      %v472 = vadd.f32 %v366, %v456
      %v473 = vadd.f32 %v371, %v457
      %v474 = vadd.f32 %v376, %v458
      %v475 = vadd.f32 %v381, %v459
      %v476 = vadd.f32 %v386, %v460
      %v477 = vadd.f32 %v391, %v461
      %v478 = vadd.f32 %v396, %v462
      %v479 = vmul.f32 %v463, 0.7978846
      %v480 = vmul.f32 %v464, 0.7978846
      %v481 = vmul.f32 %v465, 0.7978846
      %v482 = vmul.f32 %v466, 0.7978846
      %v483 = vmul.f32 %v467, 0.7978846
      %v484 = vmul.f32 %v468, 0.7978846
      %v485 = vmul.f32 %v469, 0.7978846
      %v486 = vmul.f32 %v470, 0.7978846
      %v487 = vmul.f32 %v471, 0.7978846
      %v488 = vmul.f32 %v472, 0.7978846
      %v489 = vmul.f32 %v473, 0.7978846
      %v490 = vmul.f32 %v474, 0.7978846
      %v491 = vmul.f32 %v475, 0.7978846
      %v492 = vmul.f32 %v476, 0.7978846
      %v493 = vmul.f32 %v477, 0.7978846
      %v494 = vmul.f32 %v478, 0.7978846
      %v495 = vtanh.pop %v479
      %v496 = vtanh.pop %v480
      %v497 = vtanh.pop %v481
      %v498 = vtanh.pop %v482
      %v499 = vtanh.pop %v483
      %v500 = vtanh.pop %v484
      %v501 = vtanh.pop %v485
      %v502 = vtanh.pop %v486
      %v503 = vtanh.pop %v487
      %v504 = vtanh.pop %v488
      %v505 = vtanh.pop %v489
      %v506 = vtanh.pop %v490
      %v507 = vtanh.pop %v491
      %v508 = vtanh.pop %v492
      %v509 = vtanh.pop %v493
      %v510 = vtanh.pop %v494
      %v511 = vadd.f32 %v495, 1.0
      %v512 = vadd.f32 %v496, 1.0
      %v513 = vadd.f32 %v497, 1.0
      %v514 = vadd.f32 %v498, 1.0
      %v515 = vadd.f32 %v499, 1.0
      %v516 = vadd.f32 %v500, 1.0
      %v517 = vadd.f32 %v501, 1.0
      %v518 = vadd.f32 %v502, 1.0
      %v519 = vadd.f32 %v503, 1.0
      %v520 = vadd.f32 %v504, 1.0
      %v521 = vadd.f32 %v505, 1.0
      %v522 = vadd.f32 %v506, 1.0
      %v523 = vadd.f32 %v507, 1.0
      %v524 = vadd.f32 %v508, 1.0
      %v525 = vadd.f32 %v509, 1.0
      %v526 = vadd.f32 %v510, 1.0
      %v527 = vmul.f32 %v399, %v511
      %v528 = vmul.f32 %v400, %v512
      %v529 = vmul.f32 %v401, %v513
      %v530 = vmul.f32 %v402, %v514
      %v531 = vmul.f32 %v403, %v515
      %v532 = vmul.f32 %v404, %v516
      %v533 = vmul.f32 %v405, %v517
      %v534 = vmul.f32 %v406, %v518
      %v535 = vmul.f32 %v407, %v519
      %v536 = vmul.f32 %v408, %v520
      %v537 = vmul.f32 %v409, %v521
      %v538 = vmul.f32 %v410, %v522
      %v539 = vmul.f32 %v411, %v523
      %v540 = vmul.f32 %v412, %v524
      %v541 = vmul.f32 %v413, %v525
      %v542 = vmul.f32 %v414, %v526
      %vm543 = vcmask 130048
      %544 = vst.msk [vmem:[%s172] sm:$0xff] %vm543, %v527
      %545 = vst.msk [vmem:[%s172 + $0x8] sm:$0xff] %vm543, %v528
      %546 = vst.msk [vmem:[%s172 + $0x10] sm:$0xff] %vm543, %v529
      %547 = vst.msk [vmem:[%s172 + $0x18] sm:$0xff] %vm543, %v530
      %548 = vst.msk [vmem:[%s172 + $0x20] sm:$0xff] %vm543, %v531
      %549 = vst.msk [vmem:[%s172 + $0x28] sm:$0xff] %vm543, %v532
      %550 = vst.msk [vmem:[%s172 + $0x30] sm:$0xff] %vm543, %v533
      %551 = vst.msk [vmem:[%s172 + $0x38] sm:$0xff] %vm543, %v534
      %552 = vst.msk [vmem:[%s172 + $0x40] sm:$0xff] %vm543, %v535
      %553 = vst.msk [vmem:[%s172 + $0x48] sm:$0xff] %vm543, %v536
      %554 = vst.msk [vmem:[%s172 + $0x50] sm:$0xff] %vm543, %v537
      %555 = vst.msk [vmem:[%s172 + $0x58] sm:$0xff] %vm543, %v538
      %556 = vst.msk [vmem:[%s172 + $0x60] sm:$0xff] %vm543, %v539
      %557 = vst.msk [vmem:[%s172 + $0x68] sm:$0xff] %vm543, %v540
      %558 = vst.msk [vmem:[%s172 + $0x70] sm:$0xff] %vm543, %v541
      %559 = vst.msk [vmem:[%s172 + $0x78] sm:$0xff] %vm543, %v542
      %s560 = smul.u32 16, %s14
      %p561 = scmp.lt.s32.totalorder %s560, 255
      %s562 = scalar_select %p561, %s560, 255
      %s563 = smul.addr %s562, 8
      %s564 = scalar_lea.vmem %s3, %s563
      // Predicated region
      $region33: #{tpu_custom_call.1} parent=31 // pred_check
        %p565 = pneg %p100
      $region34: #{tpu_custom_call.1} parent=31 // pred_check_branch
        %567 = sbr.rel (%p565) target = $region36
      $region35: #{tpu_custom_call.1} parent=31 // pred_region
        %s568 = smul.u32 16, %s14
      $region36: #{tpu_custom_call.1} parent=31 // pred_fallthru
        _
    $region32: #{tpu_custom_call.1} parent=5 // pred_fallthru
      _
    %p569 = scmp.le.s32.totalorder 2, %s9
    // Predicated region
    $region37: #{tpu_custom_call.1} parent=5 // pred_check
      %p570 = pneg %p569
    $region38: #{tpu_custom_call.1} parent=5 // pred_check_branch
      %572 = sbr.rel (%p570) target = $region40
    $region39: #{tpu_custom_call.1} parent=5 // pred_region
      %s573 = ssub.s32 %s9, 2
      // Predicated region
      $region41: #{tpu_custom_call.1} parent=39 // pred_check
        %p574 = pneg %p106
      $region42: #{tpu_custom_call.1} parent=39 // pred_check_branch
        %576 = sbr.rel (%p574) target = $region44
      $region43: #{tpu_custom_call.1} parent=39 // pred_region
        %s577 = smul.u32 16, %s15
        %p578 = scmp.lt.s32.totalorder %s577, 255
        %s579 = scalar_select %p578, %s577, 255
        %s580 = smul.addr %s579, 8
        %s581 = scalar_lea.vmem %s3, %s580
      $region44: #{tpu_custom_call.1} parent=39 // pred_fallthru
        _
    $region40: #{tpu_custom_call.1} parent=5 // pred_fallthru
      _
  $region6: #{tpu_custom_call.1} parent=0 // loop_footer
    %s13 = sadd.s32 1, %s9
  $region7: #{tpu_custom_call.1} parent=0 // loop_footer_branch
    %8 = sbr.rel target = $region3
  $region8: #{tpu_custom_call.1} parent=0 // loop_exit
    _

</llo_original>
